<compile_context>
chip_gen: v7x
topology: tpu7x:2x2x1
jax: 0.10.0
libtpu: 0.0.40
codegen_flags: <defaults>
</compile_context>

<pallas_src>
import jax
import jax.numpy as jnp
from jax.experimental import pallas as pl
from jax.experimental.pallas import tpu as pltpu


def _round_up(n, m):
    return ((n + m - 1) // m) * m


def fuse_vae_hand_encoder_params(w1, b1, w2, b2):
    """One-time (parameter-load time) algebraic fusion of fc1/fc2.

    (x @ W1^T + b1) @ W2^T + b2  ==  x @ (W2 @ W1)^T + (b1 @ W2^T + b2)
    Valid because VAEHand_Encoder has no nonlinearity between fc1 and fc2.

    Returns:
      w_fused: (in_dim, latent_dims)  -- pre-transposed so the MXU consumes it
                                         directly (no in-kernel transpose).
      b_fused: (1, latent_dims)
    """
    w_fused = jnp.transpose(jnp.dot(w2, w1))        # (in_dim, latent_dims)
    b_fused = jnp.dot(b1, jnp.transpose(w2)) + b2   # (1, latent_dims)
    return w_fused, b_fused


def _encoder_kernel(x_ref, w_ref, b_ref, out_ref):
    # Single fused affine map: (tb, in_dim) @ (in_dim, latent) + (1, latent)
    acc = jnp.dot(x_ref[...], w_ref[...], preferred_element_type=jnp.float32)
    out_ref[...] = (acc + b_ref[...]).astype(out_ref.dtype)


def vae_hand_encoder_fused(x, w_fused, b_fused, *, tile_b=4096,
                           small_batch_threshold=64):
    """x: (B, in_dim). w_fused: (in_dim, latent). b_fused: (1, latent).
    Returns (B, latent) in x.dtype (f32 accumulation on the MXU)."""
    B, in_dim = x.shape
    latent_dims = w_fused.shape[1]
    out_dtype = x.dtype

    # Small-batch bypass: at tiny B the pallas_call fixed cost (custom-call
    # setup, DMA descriptor issue, pipeline prologue/epilogue) dwarfs the
    # sub-microsecond of work; a fused XLA dot has the same HBM traffic.
    if B < small_batch_threshold:
        y = jnp.dot(x, w_fused, preferred_element_type=jnp.float32) + b_fused
        return y.astype(out_dtype)

    # Tile selection:
    #   * multiple of 8 (sublane) so the BlockSpec is legal for any B,
    #   * capped at ceil(B/2) so the grid has >= 2 steps (both TCs on v7x),
    #   * capped at tile_b: x+out tiles lane-pad to ~tb KiB each, so a 4096-row
    #     tile double-buffered is a few MiB — under every scoped-VMEM default.
    tb = max(8, min(tile_b, _round_up(pl.cdiv(B, 2), 8)))
    grid = (pl.cdiv(B, tb),)   # no padding; Pallas masks the partial last block

    return pl.pallas_call(
        _encoder_kernel,
        out_shape=jax.ShapeDtypeStruct((B, latent_dims), out_dtype),
        grid=grid,
        in_specs=[
            # x: streamed over the batch grid, double-buffered by Pallas.
            pl.BlockSpec((tb, in_dim), lambda i: (i, 0)),
            # fused weight / bias: same block every step -> VMEM-resident.
            pl.BlockSpec((in_dim, latent_dims), lambda i: (0, 0)),
            pl.BlockSpec((1, latent_dims), lambda i: (0, 0)),
        ],
        out_specs=pl.BlockSpec((tb, latent_dims), lambda i: (i, 0)),
        compiler_params=pltpu.CompilerParams(
            dimension_semantics=("parallel",),
        ),
    )(x, w_fused, b_fused)


def vae_hand_encoder(x, w1, b1, w2, b2, **kw):
    """Convenience entry with raw nn.Linear-layout params. In production, call
    fuse_vae_hand_encoder_params once at parameter-load time and use
    vae_hand_encoder_fused directly (avoids the per-call fusion dispatches)."""
    w_fused, b_fused = fuse_vae_hand_encoder_params(w1, b1, w2, b2)
    return vae_hand_encoder_fused(x, w_fused, b_fused, **kw)


if __name__ == "__main__":
    num_joints, latent_premap_dims, latent_dims = 21, 40, 23
    in_dim = num_joints * 3  # 63

    key = jax.random.PRNGKey(0)
    kx, k1, k2, k3, k4 = jax.random.split(key, 5)
    # nn.Linear layout: weight (out_features, in_features); bias as (1, out).
    w1 = jax.random.normal(k1, (latent_premap_dims, in_dim), jnp.float32) * 0.05
    b1 = jax.random.normal(k2, (1, latent_premap_dims), jnp.float32) * 0.05
    w2 = jax.random.normal(k3, (latent_dims, latent_premap_dims), jnp.float32) * 0.05
    b2 = jax.random.normal(k4, (1, latent_dims), jnp.float32) * 0.05

    # One-time fusion (hoisted to "parameter-load time").
    w_fused, b_fused = jax.block_until_ready(
        fuse_vae_hand_encoder_params(w1, b1, w2, b2))

    def ref_fn(xx):  # plain JAX reference, same math as torch forward
        return (xx @ w1.T + b1) @ w2.T + b2

    # 1) Production-shaped batch (B=2): exercises the small-batch XLA bypass.
    x_small = jax.random.normal(kx, (2, in_dim), jnp.float32)
    out_small = jax.block_until_ready(
        vae_hand_encoder_fused(x_small, w_fused, b_fused))
    assert out_small.shape == (2, latent_dims), out_small.shape
    assert jnp.allclose(out_small, ref_fn(x_small), atol=1e-4, rtol=1e-4), \
        float(jnp.max(jnp.abs(out_small - ref_fn(x_small))))

    # 2) Pallas path, B an exact multiple of the tile (tb=128, grid=(2,)).
    x_mid = jax.random.normal(jax.random.PRNGKey(1), (256, in_dim), jnp.float32)
    out_mid = jax.block_until_ready(
        vae_hand_encoder_fused(x_mid, w_fused, b_fused))
    assert out_mid.shape == (256, latent_dims), out_mid.shape
    assert jnp.allclose(out_mid, ref_fn(x_mid), atol=1e-4, rtol=1e-4), \
        float(jnp.max(jnp.abs(out_mid - ref_fn(x_mid))))

    # 3) Pallas path with a partial final block (B=1000, tb=504, grid=(2,)):
    #    no wrapper padding, Pallas masks the last block's writes.
    x_big = jax.random.normal(jax.random.PRNGKey(2), (1000, in_dim), jnp.float32)
    out_big = jax.block_until_ready(
        vae_hand_encoder_fused(x_big, w_fused, b_fused))
    assert out_big.shape == (1000, latent_dims), out_big.shape
    assert jnp.allclose(out_big, ref_fn(x_big), atol=1e-4, rtol=1e-4), \
        float(jnp.max(jnp.abs(out_big - ref_fn(x_big))))

    # Also check the unfused-parameter convenience entry point once.
    out_conv = jax.block_until_ready(vae_hand_encoder(x_big, w1, b1, w2, b2))
    assert jnp.allclose(out_conv, ref_fn(x_big), atol=1e-4, rtol=1e-4)

    print("KERNEL_OK")
</pallas_src>

<mosaic_0001>
module attributes {stable_mosaic.version = 11 : i64} {
  func.func @_encoder_kernel(%arg0: i32, %arg1: memref<128x63xf32, #tpu.memory_space<vmem>>, %arg2: memref<63x23xf32, #tpu.memory_space<vmem>>, %arg3: memref<1x23xf32, #tpu.memory_space<vmem>>, %arg4: memref<128x23xf32, #tpu.memory_space<vmem>>) attributes {dimension_semantics = [#tpu.dimension_semantics<parallel>], iteration_bounds = array<i64: 2>, scalar_prefetch = 0 : i64, scratch_operands = 0 : i64, tpu.core_type = #tpu.core_type<tc>, window_params = [{transform_indices = @transform_0, window_bounds = array<i64: 128, 63>}, {pipeline_mode = #tpu.pipeline_mode<synchronous>, transform_indices = @transform_1, window_bounds = array<i64: 63, 23>}, {pipeline_mode = #tpu.pipeline_mode<synchronous>, transform_indices = @transform_2, window_bounds = array<i64: 1, 23>}, {transform_indices = @transform_3, window_bounds = array<i64: 128, 23>}]} {
    %c0 = arith.constant 0 : index
    %c0_0 = arith.constant 0 : index
    %0 = vector.load %arg1[%c0, %c0_0] : memref<128x63xf32, #tpu.memory_space<vmem>>, vector<128x63xf32>
    %c0_1 = arith.constant 0 : index
    %c0_2 = arith.constant 0 : index
    %1 = vector.load %arg2[%c0_1, %c0_2] : memref<63x23xf32, #tpu.memory_space<vmem>>, vector<63x23xf32>
    %cst = arith.constant dense<0.000000e+00> : vector<128x23xf32>
    %2 = tpu.matmul %0, %1, %cst {dimension_numbers = #tpu.dot_dimension_numbers<[1], [0], [0], [1], [0, 0, 1, 1], [], []>} : vector<128x63xf32>, vector<63x23xf32>, vector<128x23xf32> -> vector<128x23xf32>
    %c0_3 = arith.constant 0 : index
    %c0_4 = arith.constant 0 : index
    %3 = vector.load %arg3[%c0_3, %c0_4] : memref<1x23xf32, #tpu.memory_space<vmem>>, vector<1x23xf32>
    %4 = vector.broadcast %3 : vector<1x23xf32> to vector<128x23xf32>
    %5 = arith.addf %2, %4 : vector<128x23xf32>
    %c0_5 = arith.constant 0 : index
    %c0_6 = arith.constant 0 : index
    %6 = vector.load %arg4[%c0_5, %c0_6] : memref<128x23xf32, #tpu.memory_space<vmem>>, vector<128x23xf32>
    tpu.vector_store %arg4[%c0_5, %c0_6], %5 {strides = array<i32>} : memref<128x23xf32, #tpu.memory_space<vmem>>, vector<128x23xf32>,
    return
  }
  func.func @transform_0(%arg0: i32) -> (i32, i32) {
    %c0_i32 = arith.constant 0 : i32
    %c0_i32_0 = arith.constant 0 : i32
    return %arg0, %c0_i32 : i32, i32
  }
  func.func @transform_1(%arg0: i32) -> (i32, i32) {
    %c0_i32 = arith.constant 0 : i32
    %c0_i32_0 = arith.constant 0 : i32
    %c0_i32_1 = arith.constant 0 : i32
    return %c0_i32, %c0_i32_0 : i32, i32
  }
  func.func @transform_2(%arg0: i32) -> (i32, i32) {
    %c0_i32 = arith.constant 0 : i32
    %c0_i32_0 = arith.constant 0 : i32
    %c0_i32_1 = arith.constant 0 : i32
    return %c0_i32, %c0_i32_0 : i32, i32
  }
  func.func @transform_3(%arg0: i32) -> (i32, i32) {
    %c0_i32 = arith.constant 0 : i32
    %c0_i32_0 = arith.constant 0 : i32
    return %arg0, %c0_i32 : i32, i32
  }
}

</mosaic_0001>

<llo_original>
// kernel: tpu_custom_call.1
$region0: #{tpu_custom_call.1}
  #allocation0 [shape = 'u32[]', space=smem, size = 0x4, offset = 0x4, fixed_abs, tag = 'smem constant byte address 0x4 - core index']
  #allocation1 [shape = 'u32[144,128]{1,0:T(1,128)}', space=vmem, size = 0x12000, scoped, tag = 'internal scratch']
  %s0 = inlined_call_operand.vmem [shape: f32[256,63], index: 0, kind: input, shape index: {}]
  %s1 = inlined_call_operand.vmem [shape: f32[63,23], index: 1, kind: input, shape index: {}]
  %s2 = inlined_call_operand.vmem [shape: f32[1,23], index: 2, kind: input, shape index: {}]
  %s3 = inlined_call_operand.vmem [shape: f32[256,23], index: 3, kind: output, shape index: {}]
  %s4 = sld [smem:[#allocation0]]
  $region45: #{tpu_custom_call.1} parent=0
    _
  %s6 = ssub.s32 1, %s4
  %s7 = scalar_select 0, %s6, %s4
  loop: start=0, step=1, limit=4
  $region2: #{tpu_custom_call.1} parent=0 // loop_pre_header
    _
  $region3: #{tpu_custom_call.1} parent=0 // loop_header
    %s9 = sphi 0, %s13
    %p10 = scmp.ge.s32.totalorder %s9, 4
    %s19 = sphi 0, %s21
    %s22 = sphi 0, %s19
    %s23 = sphi 0, %s22
    %s39 = sphi 0, %s23
    %s43 = sphi 0, %s43
    %s45 = sphi 0, %s43
    %s46 = sphi 0, %s45
    %s60 = sphi 0, %s46
    %s64 = sphi 0, %s64
    %s66 = sphi 0, %s64
    %s67 = sphi 0, %s66
    %s81 = sphi 0, %s67
    %s87 = sphi 0, %s89
    %s90 = sphi 0, %s87
    %s91 = sphi 0, %s90
    %s107 = sphi 0, %s91
  $region4: #{tpu_custom_call.1} parent=0 // loop_header_branch
    %12 = sbr.rel (%p10) target = $region8
  $region5: #{tpu_custom_call.1} parent=0 // loop_body
    %s14 = ssub.s32 %s9, 1
    %s15 = ssub.s32 %s9, 2
    %s16 = sadd.s32 %s9, 1
    %s17 = ssub.s32 %s9, %s16
    %p18 = scmp.eq.s32.totalorder %s17, 0
    %s20 = sadd.s32 %s19, 1
    %s21 = scalar_select %p18, %s19, %s20
    %p24 = pneg %p18
    %p25 = scmp.eq.s32.totalorder %s9, 1
    %p26 = por %p24, %p25
    %p27 = scmp.ne.s32.totalorder %s19, %s22
    %p28 = scmp.eq.s32.totalorder %s9, 0
    %p29 = por %p27, %p28
    %p30 = scmp.ne.s32.totalorder %s19, %s22
    %p31 = scmp.eq.s32.totalorder %s14, 1
    %p32 = por %p30, %p31
    %p33 = scmp.ne.s32.totalorder %s22, %s23
    %p34 = scmp.eq.s32.totalorder %s14, 0
    %p35 = por %p33, %p34
    %p36 = scmp.ne.s32.totalorder %s22, %s23
    %p37 = scmp.eq.s32.totalorder %s15, 1
    %p38 = por %p36, %p37
    %p40 = scmp.ne.s32.totalorder %s23, %s39
    %p41 = scmp.eq.s32.totalorder %s15, 0
    %p42 = por %p40, %p41
    %s44 = sadd.s32 %s43, 1
    %p47 = scmp.eq.s32.totalorder %s9, 1
    %p48 = scmp.ne.s32.totalorder %s43, %s45
    %p49 = scmp.eq.s32.totalorder %s9, 0
    %p50 = por %p48, %p49
    %p51 = scmp.ne.s32.totalorder %s43, %s45
    %p52 = scmp.eq.s32.totalorder %s14, 1
    %p53 = por %p51, %p52
    %p54 = scmp.ne.s32.totalorder %s45, %s46
    %p55 = scmp.eq.s32.totalorder %s14, 0
    %p56 = por %p54, %p55
    %p57 = scmp.ne.s32.totalorder %s45, %s46
    %p58 = scmp.eq.s32.totalorder %s15, 1
    %p59 = por %p57, %p58
    %p61 = scmp.ne.s32.totalorder %s46, %s60
    %p62 = scmp.eq.s32.totalorder %s15, 0
    %p63 = por %p61, %p62
    %s65 = sadd.s32 %s64, 1
    %p68 = scmp.eq.s32.totalorder %s9, 1
    %p69 = scmp.ne.s32.totalorder %s64, %s66
    %p70 = scmp.eq.s32.totalorder %s9, 0
    %p71 = por %p69, %p70
    %p72 = scmp.ne.s32.totalorder %s64, %s66
    %p73 = scmp.eq.s32.totalorder %s14, 1
    %p74 = por %p72, %p73
    %p75 = scmp.ne.s32.totalorder %s66, %s67
    %p76 = scmp.eq.s32.totalorder %s14, 0
    %p77 = por %p75, %p76
    %p78 = scmp.ne.s32.totalorder %s66, %s67
    %p79 = scmp.eq.s32.totalorder %s15, 1
    %p80 = por %p78, %p79
    %p82 = scmp.ne.s32.totalorder %s67, %s81
    %p83 = scmp.eq.s32.totalorder %s15, 0
    %p84 = por %p82, %p83
    %s85 = ssub.s32 %s9, %s16
    %p86 = scmp.eq.s32.totalorder %s85, 0
    %s88 = sadd.s32 %s87, 1
    %s89 = scalar_select %p86, %s87, %s88
    %p92 = pneg %p86
    %p93 = scmp.eq.s32.totalorder %s9, 1
    %p94 = por %p92, %p93
    %p95 = scmp.ne.s32.totalorder %s87, %s90
    %p96 = scmp.eq.s32.totalorder %s9, 0
    %p97 = por %p95, %p96
    %p98 = scmp.ne.s32.totalorder %s87, %s90
    %p99 = scmp.eq.s32.totalorder %s14, 1
    %p100 = por %p98, %p99
    %p101 = scmp.ne.s32.totalorder %s90, %s91
    %p102 = scmp.eq.s32.totalorder %s14, 0
    %p103 = por %p101, %p102
    %p104 = scmp.ne.s32.totalorder %s90, %s91
    %p105 = scmp.eq.s32.totalorder %s15, 1
    %p106 = por %p104, %p105
    %p108 = scmp.ne.s32.totalorder %s91, %s107
    %p109 = scmp.eq.s32.totalorder %s15, 0
    %p110 = por %p108, %p109
    %p111 = scmp.le.s32.totalorder 1, %s9
    %p112 = scmp.lt.s32.totalorder %s9, 3
    %p113 = pnand %p111, %p112
    %p114 = pneg %p113
    // Predicated region
    $region9: #{tpu_custom_call.1} parent=5 // pred_check
      _
    $region10: #{tpu_custom_call.1} parent=5 // pred_check_branch
      %116 = sbr.rel (%p113) target = $region12
    $region11: #{tpu_custom_call.1} parent=5 // pred_region
      %s117 = ssub.s32 %s9, 1
      // Predicated region
      $region13: #{tpu_custom_call.1} parent=11 // pred_check
        %p118 = pneg %p56
      $region14: #{tpu_custom_call.1} parent=11 // pred_check_branch
        %120 = sbr.rel (%p118) target = $region16
      $region15: #{tpu_custom_call.1} parent=11 // pred_region
        _
      $region16: #{tpu_custom_call.1} parent=11 // pred_fallthru
        _
      // Predicated region
      $region17: #{tpu_custom_call.1} parent=11 // pred_check
        %p121 = pneg %p77
      $region18: #{tpu_custom_call.1} parent=11 // pred_check_branch
        %123 = sbr.rel (%p121) target = $region20
      $region19: #{tpu_custom_call.1} parent=11 // pred_region
        _
      $region20: #{tpu_custom_call.1} parent=11 // pred_fallthru
        _
    $region12: #{tpu_custom_call.1} parent=5 // pred_fallthru
      _
    %p124 = scmp.lt.s32.totalorder %s9, 2
    // Predicated region
    $region21: #{tpu_custom_call.1} parent=5 // pred_check
      %p125 = pneg %p124
    $region22: #{tpu_custom_call.1} parent=5 // pred_check_branch
      %127 = sbr.rel (%p125) target = $region24
    $region23: #{tpu_custom_call.1} parent=5 // pred_region
      // Predicated region
      $region25: #{tpu_custom_call.1} parent=23 // pred_check
        %p128 = pneg %p29
      $region26: #{tpu_custom_call.1} parent=23 // pred_check_branch
        %130 = sbr.rel (%p128) target = $region28
      $region27: #{tpu_custom_call.1} parent=23 // pred_region
        %s131 = smul.u32 16, %s9
        %p132 = scmp.lt.s32.totalorder %s131, 31
        %s133 = scalar_select %p132, %s131, 31
        %s134 = smul.addr %s133, 8
        %s135 = scalar_lea.vmem %s0, %s134
        %s136 = smul.u32 16, %s9
      $region28: #{tpu_custom_call.1} parent=23 // pred_fallthru
        _
    $region24: #{tpu_custom_call.1} parent=5 // pred_fallthru
      _
    %p137 = scmp.le.s32.totalorder 1, %s9
    %p138 = scmp.lt.s32.totalorder %s9, 3
    %p139 = pnand %p137, %p138
    %p140 = pneg %p139
    // Predicated region
    $region29: #{tpu_custom_call.1} parent=5 // pred_check
      _
    $region30: #{tpu_custom_call.1} parent=5 // pred_check_branch
      %142 = sbr.rel (%p139) target = $region32
    $region31: #{tpu_custom_call.1} parent=5 // pred_region
      %s143 = ssub.s32 %s9, 1
      %s144 = smul.u32 16, %s14
      %p145 = scmp.lt.s32.totalorder %s144, 31
      %s146 = scalar_select %p145, %s144, 31
      %s147 = smul.addr %s146, 8
      %s148 = scalar_lea.vmem %s0, %s147
      %p149 = pneg %p35
      %p150 = pneg %p32
      %p151 = pneg %p56
      %p152 = pneg %p53
      %p153 = pneg %p77
      %p154 = pneg %p74
      %p155 = pneg %p103
      %p156 = pneg %p100
      %s157 = smul.u32 16, %s14
      %p158 = scmp.lt.s32.totalorder %s157, 31
      %s159 = scalar_select %p158, %s157, 31
      %s160 = smul.addr %s159, 8
      %s161 = scalar_lea.vmem %s3, %s160
      %s162 = smul.u32 16, %s14
      %p163 = scmp.lt.s32.totalorder %s162, 31
      %s164 = scalar_select %p163, %s162, 31
      %s165 = smul.addr %s164, 8
      %s166 = scalar_lea.vmem %s0, %s165
      %s167 = smul.u32 16, %s14
      %s168 = smul.u32 16, %s14
      %p169 = scmp.lt.s32.totalorder %s168, 31
      %s170 = scalar_select %p169, %s168, 31
      %s171 = smul.addr %s170, 8
      %s172 = scalar_lea.vmem %s3, %s171
      %s173 = smul.u32 16, %s14
      %v174 = vld [vmem:[%s166] sm:$0xff]
      %v175 = vld [vmem:[%s166 + $0x8] sm:$0xff]
      %v176 = vld [vmem:[%s166 + $0x10] sm:$0xff]
      %v177 = vld [vmem:[%s166 + $0x18] sm:$0xff]
      %v178 = vld [vmem:[%s166 + $0x20] sm:$0xff]
      %v179 = vld [vmem:[%s166 + $0x28] sm:$0xff]
      %v180 = vld [vmem:[%s166 + $0x30] sm:$0xff]
      %v181 = vld [vmem:[%s166 + $0x38] sm:$0xff]
      %v182 = vld [vmem:[%s166 + $0x40] sm:$0xff]
      %v183 = vld [vmem:[%s166 + $0x48] sm:$0xff]
      %v184 = vld [vmem:[%s166 + $0x50] sm:$0xff]
      %v185 = vld [vmem:[%s166 + $0x58] sm:$0xff]
      %v186 = vld [vmem:[%s166 + $0x60] sm:$0xff]
      %v187 = vld [vmem:[%s166 + $0x68] sm:$0xff]
      %v188 = vld [vmem:[%s166 + $0x70] sm:$0xff]
      %v189 = vld [vmem:[%s166 + $0x78] sm:$0xff]
      %v190 = vld [vmem:[%s1] sm:$0xff]
      %v191 = vld [vmem:[%s1 + $0x8] sm:$0xff]
      %v192 = vld [vmem:[%s1 + $0x10] sm:$0xff]
      %v193 = vld [vmem:[%s1 + $0x18] sm:$0xff]
      %v194 = vld [vmem:[%s1 + $0x20] sm:$0xff]
      %v195 = vld [vmem:[%s1 + $0x28] sm:$0xff]
      %v196 = vld [vmem:[%s1 + $0x30] sm:$0xff]
      %v197 = vld [vmem:[%s1 + $0x38] sm:$0x7f]
      %v198 = vld [vmem:[%s2] sm:$0x1]
      %v200 = vlaneseq
      %v201 = vshrl.u32 %v200, 7
      %v202 = vsub.s32 0, %v201
      %v203 = vrot.slane %v198, %v202
      %vm205 = vcmask 515072
      %v207 = vsel %vm205, %v174, 0
      %v210 = vsel %vm205, %v175, 0
      %v213 = vsel %vm205, %v176, 0
      %v216 = vsel %vm205, %v177, 0
      %v219 = vsel %vm205, %v178, 0
      %v222 = vsel %vm205, %v179, 0
      %v225 = vsel %vm205, %v180, 0
      %v228 = vsel %vm205, %v181, 0
      %v231 = vsel %vm205, %v182, 0
      %v234 = vsel %vm205, %v183, 0
      %v237 = vsel %vm205, %v184, 0
      %v240 = vsel %vm205, %v185, 0
      %v243 = vsel %vm205, %v186, 0
      %v246 = vsel %vm205, %v187, 0
      %v249 = vsel %vm205, %v188, 0
      %v252 = vsel %vm205, %v189, 0
      %vm254 = vcmask 1046528
      %v256 = vsel %vm254, %v197, 0
      %258 = vmatprep.subr.mxu0 0.0
      %259 = vmatpush1.msra.mxu0 %v190
      %260 = vmatprep.subr.mxu0 0.0
      %261 = vmatpush1.msra.mxu0 %v191
      %262 = vmatprep.subr.mxu0 0.0
      %263 = vmatpush1.msra.mxu0 %v192
      %264 = vmatprep.subr.mxu0 0.0
      %265 = vmatpush1.msra.mxu0 %v193
      %266 = vmatprep.subr.mxu0 0.0
      %267 = vmatpush1.msra.mxu0 %v194
      %268 = vmatprep.subr.mxu0 0.0
      %269 = vmatpush1.msra.mxu0 %v195
      %270 = vmatprep.subr.mxu0 0.0
      %271 = vmatpush1.msra.mxu0 %v196
      %272 = vmatprep.subr.mxu0 0.0
      %273 = vmatpush1.msra.mxu0 %v256
      %274 = vmatprep.subr.mxu0 0.0
      %275 = vmatpush1.msra.mxu0 0.0
      %276 = vmatprep.subr.mxu0 0.0
      %277 = vmatpush1.msra.mxu0 0.0
      %278 = vmatprep.subr.mxu0 0.0
      %279 = vmatpush1.msra.mxu0 0.0
      %280 = vmatprep.subr.mxu0 0.0
      %281 = vmatpush1.msra.mxu0 0.0
      %282 = vmatprep.subr.mxu0 0.0
      %283 = vmatpush1.msra.mxu0 0.0
      %284 = vmatprep.subr.mxu0 0.0
      %285 = vmatpush1.msra.mxu0 0.0
      %286 = vmatprep.subr.mxu0 0.0
      %287 = vmatpush1.msra.mxu0 0.0
      %288 = vmatprep.subr.mxu0 0.0
      %289 = vmatpush1.msra.mxu0 0.0
      %290 = vmatprep.subr.mxu0 0.0
      %291 = vmatpush1.msra.mxu0 0.0
      %292 = vmatprep.subr.mxu0 0.0
      %293 = vmatpush1.msra.mxu0 0.0
      %294 = vmatprep.subr.mxu0 0.0
      %295 = vmatpush1.msra.mxu0 0.0
      %296 = vmatprep.subr.mxu0 0.0
      %297 = vmatpush1.msra.mxu0 0.0
      %298 = vmatprep.subr.mxu0 0.0
      %299 = vmatpush1.msra.mxu0 0.0
      %300 = vmatprep.subr.mxu0 0.0
      %301 = vmatpush1.msra.mxu0 0.0
      %302 = vmatprep.subr.mxu0 0.0
      %303 = vmatpush1.msra.mxu0 0.0
      %304 = vmatprep.subr.mxu0 0.0
      %305 = vmatpush1.msra.mxu0 0.0
      %306 = vmatprep.subr.mxu0 0.0
      %307 = vmatpush1.msra.mxu0 0.0
      %308 = vmatprep.subr.mxu0 0.0
      %309 = vmatpush1.msra.mxu0 0.0
      %310 = vmatprep.subr.mxu0 0.0
      %311 = vmatpush1.msra.mxu0 0.0
      %312 = vmatprep.subr.mxu0 0.0
      %313 = vmatpush1.msra.mxu0 0.0
      %314 = vmatprep.subr.mxu0 0.0
      %315 = vmatpush1.msra.mxu0 0.0
      %316 = vmatprep.subr.mxu0 0.0
      %317 = vmatpush1.msra.mxu0 0.0
      %318 = vmatprep.subr.mxu0 0.0
      %319 = vmatpush1.msra.mxu0 0.0
      %320 = vmatprep.subr.mxu0 0.0
      %321 = vmatpush1.msra.mxu0 0.0
      %322 = vmatprep.mubr.f32.mxu0 0.0
      %323 = vmatmul.mubr.f32.gmra.mrb[0].mxu0 %v207
      %v324 = vpop.f32.mrb[0].mxu0
      %v325 = vadd.f32 %v203, %v324
      %v326 = vpop.f32.mrb[0].mxu0
      %327 = vmatprep.mubr.f32.mxu0 0.0
      %328 = vmatmul.mubr.f32.gmra.mrb[0].mxu0 %v210
      %v329 = vpop.f32.mrb[0].mxu0
      %v330 = vadd.f32 %v203, %v329
      %v331 = vpop.f32.mrb[0].mxu0
      %332 = vmatprep.mubr.f32.mxu0 0.0
      %333 = vmatmul.mubr.f32.gmra.mrb[0].mxu0 %v213
      %v334 = vpop.f32.mrb[0].mxu0
      %v335 = vadd.f32 %v203, %v334
      %v336 = vpop.f32.mrb[0].mxu0
      %337 = vmatprep.mubr.f32.mxu0 0.0
      %338 = vmatmul.mubr.f32.gmra.mrb[0].mxu0 %v216
      %v339 = vpop.f32.mrb[0].mxu0
      %v340 = vadd.f32 %v203, %v339
      %v341 = vpop.f32.mrb[0].mxu0
      %342 = vmatprep.mubr.f32.mxu0 0.0
      %343 = vmatmul.mubr.f32.gmra.mrb[0].mxu0 %v219
      %v344 = vpop.f32.mrb[0].mxu0
      %v345 = vadd.f32 %v203, %v344
      %v346 = vpop.f32.mrb[0].mxu0
      %347 = vmatprep.mubr.f32.mxu0 0.0
      %348 = vmatmul.mubr.f32.gmra.mrb[0].mxu0 %v222
      %v349 = vpop.f32.mrb[0].mxu0
      %v350 = vadd.f32 %v203, %v349
      %v351 = vpop.f32.mrb[0].mxu0
      %352 = vmatprep.mubr.f32.mxu0 0.0
      %353 = vmatmul.mubr.f32.gmra.mrb[0].mxu0 %v225
      %v354 = vpop.f32.mrb[0].mxu0
      %v355 = vadd.f32 %v203, %v354
      %v356 = vpop.f32.mrb[0].mxu0
      %357 = vmatprep.mubr.f32.mxu0 0.0
      %358 = vmatmul.mubr.f32.gmra.mrb[0].mxu0 %v228
      %v359 = vpop.f32.mrb[0].mxu0
      %v360 = vadd.f32 %v203, %v359
      %v361 = vpop.f32.mrb[0].mxu0
      %362 = vmatprep.mubr.f32.mxu0 0.0
      %363 = vmatmul.mubr.f32.gmra.mrb[0].mxu0 %v231
      %v364 = vpop.f32.mrb[0].mxu0
      %v365 = vadd.f32 %v203, %v364
      %v366 = vpop.f32.mrb[0].mxu0
      %367 = vmatprep.mubr.f32.mxu0 0.0
      %368 = vmatmul.mubr.f32.gmra.mrb[0].mxu0 %v234
      %v369 = vpop.f32.mrb[0].mxu0
      %v370 = vadd.f32 %v203, %v369
      %v371 = vpop.f32.mrb[0].mxu0
      %372 = vmatprep.mubr.f32.mxu0 0.0
      %373 = vmatmul.mubr.f32.gmra.mrb[0].mxu0 %v237
      %v374 = vpop.f32.mrb[0].mxu0
      %v375 = vadd.f32 %v203, %v374
      %v376 = vpop.f32.mrb[0].mxu0
      %377 = vmatprep.mubr.f32.mxu0 0.0
      %378 = vmatmul.mubr.f32.gmra.mrb[0].mxu0 %v240
      %v379 = vpop.f32.mrb[0].mxu0
      %v380 = vadd.f32 %v203, %v379
      %v381 = vpop.f32.mrb[0].mxu0
      %382 = vmatprep.mubr.f32.mxu0 0.0
      %383 = vmatmul.mubr.f32.gmra.mrb[0].mxu0 %v243
      %v384 = vpop.f32.mrb[0].mxu0
      %v385 = vadd.f32 %v203, %v384
      %v386 = vpop.f32.mrb[0].mxu0
      %387 = vmatprep.mubr.f32.mxu0 0.0
      %388 = vmatmul.mubr.f32.gmra.mrb[0].mxu0 %v246
      %v389 = vpop.f32.mrb[0].mxu0
      %v390 = vadd.f32 %v203, %v389
      %v391 = vpop.f32.mrb[0].mxu0
      %392 = vmatprep.mubr.f32.mxu0 0.0
      %393 = vmatmul.mubr.f32.gmra.mrb[0].mxu0 %v249
      %v394 = vpop.f32.mrb[0].mxu0
      %v395 = vadd.f32 %v203, %v394
      %v396 = vpop.f32.mrb[0].mxu0
      %397 = vmatprep.mubr.f32.mxu0 0.0
      %398 = vmatmul.mubr.f32.gmra.mrb[0].mxu0 %v252
      %v399 = vpop.f32.mrb[0].mxu0
      %v400 = vadd.f32 %v203, %v399
      %v401 = vpop.f32.mrb[0].mxu0
      %402 = vdwg.mxu0
      %vm403 = vcmask 187392
      %404 = vst.msk [vmem:[%s172] sm:$0xff] %vm403, %v325
      %405 = vst.msk [vmem:[%s172 + $0x8] sm:$0xff] %vm403, %v330
      %406 = vst.msk [vmem:[%s172 + $0x10] sm:$0xff] %vm403, %v335
      %407 = vst.msk [vmem:[%s172 + $0x18] sm:$0xff] %vm403, %v340
      %408 = vst.msk [vmem:[%s172 + $0x20] sm:$0xff] %vm403, %v345
      %409 = vst.msk [vmem:[%s172 + $0x28] sm:$0xff] %vm403, %v350
      %410 = vst.msk [vmem:[%s172 + $0x30] sm:$0xff] %vm403, %v355
      %411 = vst.msk [vmem:[%s172 + $0x38] sm:$0xff] %vm403, %v360
      %412 = vst.msk [vmem:[%s172 + $0x40] sm:$0xff] %vm403, %v365
      %413 = vst.msk [vmem:[%s172 + $0x48] sm:$0xff] %vm403, %v370
      %414 = vst.msk [vmem:[%s172 + $0x50] sm:$0xff] %vm403, %v375
      %415 = vst.msk [vmem:[%s172 + $0x58] sm:$0xff] %vm403, %v380
      %416 = vst.msk [vmem:[%s172 + $0x60] sm:$0xff] %vm403, %v385
      %417 = vst.msk [vmem:[%s172 + $0x68] sm:$0xff] %vm403, %v390
      %418 = vst.msk [vmem:[%s172 + $0x70] sm:$0xff] %vm403, %v395
      %419 = vst.msk [vmem:[%s172 + $0x78] sm:$0xff] %vm403, %v400
      %s420 = smul.u32 16, %s14
      %p421 = scmp.lt.s32.totalorder %s420, 31
      %s422 = scalar_select %p421, %s420, 31
      %s423 = smul.addr %s422, 8
      %s424 = scalar_lea.vmem %s3, %s423
      // Predicated region
      $region33: #{tpu_custom_call.1} parent=31 // pred_check
        %p425 = pneg %p100
      $region34: #{tpu_custom_call.1} parent=31 // pred_check_branch
        %427 = sbr.rel (%p425) target = $region36
      $region35: #{tpu_custom_call.1} parent=31 // pred_region
        %s428 = smul.u32 16, %s14
      $region36: #{tpu_custom_call.1} parent=31 // pred_fallthru
        _
    $region32: #{tpu_custom_call.1} parent=5 // pred_fallthru
      _
    %p429 = scmp.le.s32.totalorder 2, %s9
    // Predicated region
    $region37: #{tpu_custom_call.1} parent=5 // pred_check
      %p430 = pneg %p429
    $region38: #{tpu_custom_call.1} parent=5 // pred_check_branch
      %432 = sbr.rel (%p430) target = $region40
    $region39: #{tpu_custom_call.1} parent=5 // pred_region
      %s433 = ssub.s32 %s9, 2
      // Predicated region
      $region41: #{tpu_custom_call.1} parent=39 // pred_check
        %p434 = pneg %p106
      $region42: #{tpu_custom_call.1} parent=39 // pred_check_branch
        %436 = sbr.rel (%p434) target = $region44
      $region43: #{tpu_custom_call.1} parent=39 // pred_region
        %s437 = smul.u32 16, %s15
        %p438 = scmp.lt.s32.totalorder %s437, 31
        %s439 = scalar_select %p438, %s437, 31
        %s440 = smul.addr %s439, 8
        %s441 = scalar_lea.vmem %s3, %s440
      $region44: #{tpu_custom_call.1} parent=39 // pred_fallthru
        _
    $region40: #{tpu_custom_call.1} parent=5 // pred_fallthru
      _
  $region6: #{tpu_custom_call.1} parent=0 // loop_footer
    %s13 = sadd.s32 1, %s9
  $region7: #{tpu_custom_call.1} parent=0 // loop_footer_branch
    %8 = sbr.rel target = $region3
  $region8: #{tpu_custom_call.1} parent=0 // loop_exit
    _

</llo_original>
